<compile_context>
chip_gen: v7x
topology: tpu7x:2x2x1
jax: 0.10.0
libtpu: 0.0.40
codegen_flags: <defaults>
</compile_context>

<pallas_src>
import functools

import jax
import jax.numpy as jnp
from jax import lax
from jax.experimental import pallas as pl
from jax.experimental.pallas import tpu as pltpu


# ----------------------------------------------------------------------------
# K1: generic tiled matmul + bias (stand-in Encoder 1x1 conv)
# ----------------------------------------------------------------------------
def _matmul_bias_kernel(x_ref, w_ref, b_ref, o_ref):
    o_ref[...] = (
        jnp.dot(x_ref[...], w_ref[...], preferred_element_type=jnp.float32)
        + b_ref[...]
    ).astype(o_ref.dtype)


def matmul_bias(x, w, b, *, tm=128):
    """x: (M, K), w: (K, N), b: (N,) -> (M, N). cdiv-tiled over M with padding."""
    M, K = x.shape
    N = w.shape[1]
    Mp = pl.cdiv(M, tm) * tm
    xp = jnp.pad(x, ((0, Mp - M), (0, 0))) if Mp != M else x
    out = pl.pallas_call(
        _matmul_bias_kernel,
        out_shape=jax.ShapeDtypeStruct((Mp, N), jnp.float32),
        grid=(Mp // tm,),
        in_specs=[
            pl.BlockSpec((tm, K), lambda i: (i, 0)),
            pl.BlockSpec((K, N), lambda i: (0, 0)),
            pl.BlockSpec((1, N), lambda i: (0, 0)),
        ],
        out_specs=pl.BlockSpec((tm, N), lambda i: (i, 0)),
        compiler_params=pltpu.CompilerParams(dimension_semantics=("parallel",)),
    )(xp, w, b.reshape(1, N))
    return out[:M] if Mp != M else out


# ----------------------------------------------------------------------------
# K2: fused GroupNorm + mask split + q/k/v + multi-head attention + to_out
#     one grid step per (branch, batch); all heads handled inside the step.
# ----------------------------------------------------------------------------
def _fused_interaction_kernel(
    enc_ref, mcol_ref, mkey_ref, gamma_ref, beta_ref, gmat_ref,
    wq_ref, wk_ref, wv_ref, wo_ref, bo_ref, o_ref,
    *, heads, dim_head, num_groups, eps,
):
    x = enc_ref[...]                                   # (HW, C) f32, token layout
    HW, C = x.shape
    cg = C // num_groups
    cnt = float(HW * cg)

    # GroupNorm stats in token layout via a (C x G) one-hot matmul — avoids
    # any lane-crossing (C, HW)->(G, cg, HW) reshape.
    gmat = gmat_ref[...]                               # (C, G) one-hot
    s1 = jnp.sum(x, axis=0, keepdims=True)             # (1, C)
    s2 = jnp.sum(x * x, axis=0, keepdims=True)         # (1, C)
    gsum = jnp.dot(s1, gmat, preferred_element_type=jnp.float32)   # (1, G)
    gsq = jnp.dot(s2, gmat, preferred_element_type=jnp.float32)    # (1, G)
    mean_g = gsum / cnt
    var_g = gsq / cnt - mean_g * mean_g
    inv_g = lax.rsqrt(var_g + eps)
    dn_scatter = (((1,), (1,)), ((), ()))              # contract on G of both
    mean_c = lax.dot_general(mean_g, gmat, dn_scatter,
                             preferred_element_type=jnp.float32)   # (1, C)
    inv_c = lax.dot_general(inv_g, gmat, dn_scatter,
                            preferred_element_type=jnp.float32)    # (1, C)
    normed = (x - mean_c) * inv_c * gamma_ref[...] + beta_ref[...]

    # fg/bg mask multiply fused into the projection prologue (no HBM round-trip).
    m = mcol_ref[...]                                  # (HW, 1) float mask
    fg = normed * m
    bg = normed * (1.0 - m)
    q = jnp.dot(fg, wq_ref[...], preferred_element_type=jnp.float32)  # (HW, C)
    k = jnp.dot(bg, wk_ref[...], preferred_element_type=jnp.float32)
    v = jnp.dot(bg, wv_ref[...], preferred_element_type=jnp.float32)

    scale = dim_head ** (-0.5)
    neg = -jnp.finfo(jnp.float32).max
    key_mask = mkey_ref[...] > 0.5                     # (1, HW): True = masked key

    outs = []
    for h in range(heads):                             # unrolled; all heads per step
        sl = slice(h * dim_head, (h + 1) * dim_head)
        qh, kh, vh = q[:, sl], k[:, sl], v[:, sl]
        # contract last dims directly — no k.T transpose materialized
        sim = lax.dot_general(qh, kh, (((1,), (1,)), ((), ())),
                              preferred_element_type=jnp.float32) * scale  # (HW, HW)
        sim = jnp.where(key_mask, neg, sim)            # masked_fill semantics
        p = jax.nn.softmax(sim, axis=-1)
        outs.append(jnp.dot(p, vh, preferred_element_type=jnp.float32))    # (HW, dh)
    att = jnp.concatenate(outs, axis=-1)               # (HW, C), lane-dense

    o_ref[...] = (
        jnp.dot(att, wo_ref[...], preferred_element_type=jnp.float32) + bo_ref[...]
    ).astype(o_ref.dtype)


def fused_interaction(enc4, m_col, m_key, gamma, beta, gmat, wq, wk, wv, wo, bo,
                      *, heads, dim_head, num_groups=32, eps=1e-6):
    """enc4: (2, B, HW, C) encoded tokens for both branches; returns same shape."""
    _, B, HW, C = enc4.shape
    kernel = functools.partial(
        _fused_interaction_kernel,
        heads=heads, dim_head=dim_head, num_groups=num_groups, eps=eps)
    return pl.pallas_call(
        kernel,
        out_shape=jax.ShapeDtypeStruct((2, B, HW, C), jnp.float32),
        grid=(2, B),
        in_specs=[
            pl.BlockSpec((None, None, HW, C), lambda r, b: (r, b, 0, 0)),  # enc
            pl.BlockSpec((None, HW, 1), lambda r, b: (b, 0, 0)),           # m_col
            pl.BlockSpec((None, 1, HW), lambda r, b: (b, 0, 0)),           # m_key
            pl.BlockSpec((1, C), lambda r, b: (0, 0)),                     # gamma
            pl.BlockSpec((1, C), lambda r, b: (0, 0)),                     # beta
            pl.BlockSpec((C, gmat.shape[1]), lambda r, b: (0, 0)),         # gmat
            pl.BlockSpec((None, C, C), lambda r, b: (r, 0, 0)),            # wq
            pl.BlockSpec((None, C, C), lambda r, b: (r, 0, 0)),            # wk
            pl.BlockSpec((None, C, C), lambda r, b: (r, 0, 0)),            # wv
            pl.BlockSpec((None, C, C), lambda r, b: (r, 0, 0)),            # wo
            pl.BlockSpec((None, 1, C), lambda r, b: (r, 0, 0)),            # bo
        ],
        out_specs=pl.BlockSpec((None, None, HW, C), lambda r, b: (r, b, 0, 0)),
        compiler_params=pltpu.CompilerParams(
            dimension_semantics=("parallel", "parallel")),
    )(enc4, m_col, m_key, gamma, beta, gmat, wq, wk, wv, wo, bo)


# ----------------------------------------------------------------------------
# K3: fused fc (Conv1d k=1) + conv1 (Conv2d k=1) + mask blend + decoder
# ----------------------------------------------------------------------------
def _fuse_tail_kernel(a_ref, u_ref, f1_ref, m_ref,
                      wfa_ref, wfu_ref, bfc_ref, wc1_ref, bc1_ref,
                      wdec_ref, bdec_ref, o_ref):
    # fc over channel-concat, split into two matmuls so no concat materializes.
    inter = (jnp.dot(a_ref[...], wfa_ref[...], preferred_element_type=jnp.float32)
             + jnp.dot(u_ref[...], wfu_ref[...], preferred_element_type=jnp.float32)
             + bfc_ref[...])
    c1 = jnp.dot(inter, wc1_ref[...], preferred_element_type=jnp.float32) + bc1_ref[...]
    m = m_ref[...]                                     # (TM, 1)
    new = c1 * m + f1_ref[...] * (1.0 - m)             # blend fused as decoder prologue
    o_ref[...] = (
        jnp.dot(new, wdec_ref[...], preferred_element_type=jnp.float32) + bdec_ref[...]
    ).astype(o_ref.dtype)


def fuse_tail(a_tok, u_tok, f1_tok, m_col_flat, p, *, tm=128):
    M, C = a_tok.shape
    Cout = p["w_dec"].shape[1]
    Mp = pl.cdiv(M, tm) * tm
    if Mp != M:
        pad = ((0, Mp - M), (0, 0))
        a_tok = jnp.pad(a_tok, pad)
        u_tok = jnp.pad(u_tok, pad)
        f1_tok = jnp.pad(f1_tok, pad)
        m_col_flat = jnp.pad(m_col_flat, pad)
    wfc = p["w_fc"]
    out = pl.pallas_call(
        _fuse_tail_kernel,
        out_shape=jax.ShapeDtypeStruct((Mp, Cout), jnp.float32),
        grid=(Mp // tm,),
        in_specs=[
            pl.BlockSpec((tm, C), lambda i: (i, 0)),       # a_feat tokens
            pl.BlockSpec((tm, C), lambda i: (i, 0)),       # u_feat tokens
            pl.BlockSpec((tm, C), lambda i: (i, 0)),       # ori adapter tokens
            pl.BlockSpec((tm, 1), lambda i: (i, 0)),       # mask column
            pl.BlockSpec((C, C), lambda i: (0, 0)),        # w_fc (adapter half)
            pl.BlockSpec((C, C), lambda i: (0, 0)),        # w_fc (unet half)
            pl.BlockSpec((1, C), lambda i: (0, 0)),
            pl.BlockSpec((C, C), lambda i: (0, 0)),        # w_c1
            pl.BlockSpec((1, C), lambda i: (0, 0)),
            pl.BlockSpec((C, Cout), lambda i: (0, 0)),     # w_dec
            pl.BlockSpec((1, Cout), lambda i: (0, 0)),
        ],
        out_specs=pl.BlockSpec((tm, Cout), lambda i: (i, 0)),
        compiler_params=pltpu.CompilerParams(dimension_semantics=("parallel",)),
    )(a_tok, u_tok, f1_tok, m_col_flat,
      wfc[:C, :], wfc[C:, :], p["b_fc"].reshape(1, C),
      p["w_c1"], p["b_c1"].reshape(1, C),
      p["w_dec"], p["b_dec"].reshape(1, Cout))
    return out[:M] if Mp != M else out


# ----------------------------------------------------------------------------
# Forward pass (token layout end-to-end; NCHW only at the boundaries)
# ----------------------------------------------------------------------------
def dual_stream_feature_fusion(stream1, stream2, mask, params):
    """stream1/stream2: (B, Cin, H, W), mask: (B, 1, Hm, Wm) -> (B, Cin, H, W)."""
    B, Cin, H, W = stream1.shape
    HW = H * W
    heads, dim_head = params["heads"], params["dim_head"]
    inner = heads * dim_head
    num_groups = 32
    # TODO(synk): PyTorch's repeat(1, 1, W*W/HW) path only makes sense for square
    # maps; we assume H == W (repeat factor 1) like the reference usage.

    # --- NCHW -> tokens; only boundary conversion, Cin is tiny (3) -----------
    def to_tokens(s):
        return s.reshape(B, Cin, HW).transpose(0, 2, 1).reshape(B * HW, Cin)

    x_tok = jnp.concatenate([to_tokens(stream1), to_tokens(stream2)], axis=0)

    # --- Encoder (stand-in 1x1 conv), both streams in ONE launch -------------
    enc = matmul_bias(x_tok, params["w_enc"], params["b_enc"])      # (2*B*HW, inner)
    enc4 = enc.reshape(2, B, HW, inner)
    feat1_tok = enc.reshape(2, B * HW, inner)[0]                    # ori_adapter_feature

    # --- fg_mask: nearest-neighbor resize to (H, W), clamp(0, 1) -------------
    Hm, Wm = mask.shape[-2:]
    ri = (jnp.arange(H) * Hm) // H
    ci = (jnp.arange(W) * Wm) // W
    m = jnp.clip(mask[:, :, ri][:, :, :, ci], 0.0, 1.0)             # (B, 1, H, W)
    m_col = m.reshape(B, HW, 1)                                     # per-token scalar
    # mask.int().bool(): masked key positions (nonzero after truncation)
    m_key = (m.reshape(B, 1, HW).astype(jnp.int32) != 0).astype(jnp.float32)

    # --- GroupNorm group one-hot matrix (C x G), shared by both branches -----
    gmat = (jnp.arange(inner)[:, None] // (inner // num_groups)
            == jnp.arange(num_groups)[None, :]).astype(jnp.float32)

    # --- both CrossAttention branches merged into one launch -----------------
    wq = jnp.stack([params["att1"]["wq"], params["att2"]["wq"]])
    wk = jnp.stack([params["att1"]["wk"], params["att2"]["wk"]])
    wv = jnp.stack([params["att1"]["wv"], params["att2"]["wv"]])
    wo = jnp.stack([params["att1"]["wo"], params["att2"]["wo"]])
    bo = jnp.stack([params["att1"]["bo"], params["att2"]["bo"]]).reshape(2, 1, inner)

    att = fused_interaction(
        enc4, m_col, m_key,
        params["gn_gamma"].reshape(1, inner), params["gn_beta"].reshape(1, inner),
        gmat, wq, wk, wv, wo, bo,
        heads=heads, dim_head=dim_head, num_groups=num_groups, eps=1e-6,
    )                                                               # (2, B, HW, inner)
    att2 = att.reshape(2, B * HW, inner)
    a_tok, u_tok = att2[0], att2[1]

    # --- fc + conv1 + blend + decoder, fused in one launch --------------------
    out_tok = fuse_tail(a_tok, u_tok, feat1_tok, m_col.reshape(B * HW, 1), params)

    # --- tokens -> NCHW (Cout = Cin is tiny) ----------------------------------
    return out_tok.reshape(B, HW, Cin).transpose(0, 2, 1).reshape(B, Cin, H, W)


# ----------------------------------------------------------------------------
# Deterministic parameter construction
# ----------------------------------------------------------------------------
def init_params(key, channels=3, heads=8, dim_head=64):
    inner = heads * dim_head
    ks = jax.random.split(key, 20)
    n = lambda k, shape, s=0.02: (jax.random.normal(k, shape, jnp.float32) * s)

    def attn_params(k):
        kk = jax.random.split(k, 5)
        return {
            "wq": n(kk[0], (inner, inner)),
            "wk": n(kk[1], (inner, inner)),
            "wv": n(kk[2], (inner, inner)),
            "wo": n(kk[3], (inner, inner)),
            "bo": n(kk[4], (inner,)),
        }

    return {
        "heads": heads,
        "dim_head": dim_head,
        "w_enc": n(ks[0], (channels, inner)),
        "b_enc": n(ks[1], (inner,)),
        "gn_gamma": 1.0 + n(ks[2], (inner,), 0.05),
        "gn_beta": n(ks[3], (inner,), 0.05),
        "att1": attn_params(ks[4]),
        "att2": attn_params(ks[5]),
        "w_fc": n(ks[6], (2 * inner, inner)),
        "b_fc": n(ks[7], (inner,)),
        "w_c1": n(ks[8], (inner, inner)),
        "b_c1": n(ks[9], (inner,)),
        "w_dec": n(ks[10], (inner, channels)),
        "b_dec": n(ks[11], (channels,)),
    }


# ----------------------------------------------------------------------------
# Demo
# ----------------------------------------------------------------------------
if __name__ == "__main__":
    key = jax.random.PRNGKey(0)
    k_param, k_s1, k_s2, k_m = jax.random.split(key, 4)

    B, C, H, W = 2, 3, 8, 8
    params = init_params(k_param, channels=C, heads=8, dim_head=64)

    stream1 = jax.random.normal(k_s1, (B, C, H, W), jnp.float32)
    stream2 = jax.random.normal(k_s2, (B, C, H, W), jnp.float32)
    # binary foreground mask (values exactly 0.0 / 1.0, like a segmentation mask)
    mask = (jax.random.uniform(k_m, (B, 1, H, W)) > 0.5).astype(jnp.float32)

    out = dual_stream_feature_fusion(stream1, stream2, mask, params)
    out = jax.block_until_ready(out)
    assert out.shape == (B, C, H, W) and out.dtype == jnp.float32
    print("KERNEL_OK")
</pallas_src>

<mosaic_0001>
module attributes {stable_mosaic.version = 11 : i64} {
  func.func @_matmul_bias_kernel(%arg0: i32, %arg1: memref<128x3xf32, #tpu.memory_space<vmem>>, %arg2: memref<3x512xf32, #tpu.memory_space<vmem>>, %arg3: memref<1x512xf32, #tpu.memory_space<vmem>>, %arg4: memref<128x512xf32, #tpu.memory_space<vmem>>) attributes {dimension_semantics = [#tpu.dimension_semantics<parallel>], iteration_bounds = array<i64: 2>, scalar_prefetch = 0 : i64, scratch_operands = 0 : i64, tpu.core_type = #tpu.core_type<tc>, window_params = [{transform_indices = @transform_0, window_bounds = array<i64: 128, 3>}, {pipeline_mode = #tpu.pipeline_mode<synchronous>, transform_indices = @transform_1, window_bounds = array<i64: 3, 512>}, {pipeline_mode = #tpu.pipeline_mode<synchronous>, transform_indices = @transform_2, window_bounds = array<i64: 1, 512>}, {transform_indices = @transform_3, window_bounds = array<i64: 128, 512>}]} {
    %c0 = arith.constant 0 : index
    %c0_0 = arith.constant 0 : index
    %0 = vector.load %arg1[%c0, %c0_0] : memref<128x3xf32, #tpu.memory_space<vmem>>, vector<128x3xf32>
    %c0_1 = arith.constant 0 : index
    %c0_2 = arith.constant 0 : index
    %1 = vector.load %arg2[%c0_1, %c0_2] : memref<3x512xf32, #tpu.memory_space<vmem>>, vector<3x512xf32>
    %cst = arith.constant dense<0.000000e+00> : vector<128x512xf32>
    %2 = tpu.matmul %0, %1, %cst {dimension_numbers = #tpu.dot_dimension_numbers<[1], [0], [0], [1], [0, 0, 1, 1], [], []>} : vector<128x3xf32>, vector<3x512xf32>, vector<128x512xf32> -> vector<128x512xf32>
    %c0_3 = arith.constant 0 : index
    %c0_4 = arith.constant 0 : index
    %3 = vector.load %arg3[%c0_3, %c0_4] : memref<1x512xf32, #tpu.memory_space<vmem>>, vector<1x512xf32>
    %4 = vector.broadcast %3 : vector<1x512xf32> to vector<128x512xf32>
    %5 = arith.addf %2, %4 : vector<128x512xf32>
    %c0_5 = arith.constant 0 : index
    %c0_6 = arith.constant 0 : index
    %6 = vector.load %arg4[%c0_5, %c0_6] : memref<128x512xf32, #tpu.memory_space<vmem>>, vector<128x512xf32>
    tpu.vector_store %arg4[%c0_5, %c0_6], %5 {strides = array<i32>} : memref<128x512xf32, #tpu.memory_space<vmem>>, vector<128x512xf32>,
    return
  }
  func.func @transform_0(%arg0: i32) -> (i32, i32) {
    %c0_i32 = arith.constant 0 : i32
    %c0_i32_0 = arith.constant 0 : i32
    return %arg0, %c0_i32 : i32, i32
  }
  func.func @transform_1(%arg0: i32) -> (i32, i32) {
    %c0_i32 = arith.constant 0 : i32
    %c0_i32_0 = arith.constant 0 : i32
    %c0_i32_1 = arith.constant 0 : i32
    return %c0_i32, %c0_i32_0 : i32, i32
  }
  func.func @transform_2(%arg0: i32) -> (i32, i32) {
    %c0_i32 = arith.constant 0 : i32
    %c0_i32_0 = arith.constant 0 : i32
    %c0_i32_1 = arith.constant 0 : i32
    return %c0_i32, %c0_i32_0 : i32, i32
  }
  func.func @transform_3(%arg0: i32) -> (i32, i32) {
    %c0_i32 = arith.constant 0 : i32
    %c0_i32_0 = arith.constant 0 : i32
    return %arg0, %c0_i32 : i32, i32
  }
}

</mosaic_0001>

<llo_original>
// kernel: tpu_custom_call.1
$region0: #{tpu_custom_call.1}
  #allocation0 [shape = 'u32[]', space=smem, size = 0x4, offset = 0x4, fixed_abs, tag = 'smem constant byte address 0x4 - core index']
  #allocation1 [shape = 'u32[144,128]{1,0:T(1,128)}', space=vmem, size = 0x12000, scoped, tag = 'internal scratch']
  %s0 = inlined_call_operand.vmem [shape: f32[256,3], index: 0, kind: input, shape index: {}]
  %s1 = inlined_call_operand.vmem [shape: f32[3,512], index: 1, kind: input, shape index: {}]
  %s2 = inlined_call_operand.vmem [shape: f32[1,512], index: 2, kind: input, shape index: {}]
  %s3 = inlined_call_operand.hbm [shape: f32[256,512], index: 3, kind: output, shape index: {}]
  %s4 = sld [smem:[#allocation0]]
  $region45: #{tpu_custom_call.1} parent=0
    _
  %s6 = ssub.s32 1, %s4
  %s7 = scalar_select 0, %s6, %s4
  $region1: #{tpu_custom_call.1} parent=0
    #allocation2 [shape = 'u8[524288]{0}', space=vmem, size = 0x80000, scoped, tag = 'output window, operand 0']
    #allocation3 [shape = 's32[2]{0}', space=sflag, size = 0x8, scoped, tag = 'scoped memory for tpu_custom_call.1']
    %8 = vsyncpa [#allocation3], 0
    %s9 = scalar_lea.sflag [#allocation3], 1
    %10 = vsyncpa %s9, 0
    loop: start=0, step=1, limit=4
    $region2: #{tpu_custom_call.1} parent=1 // loop_pre_header
      _
    $region3: #{tpu_custom_call.1} parent=1 // loop_header
      %s12 = sphi 0, %s16
      %p13 = scmp.ge.s32.totalorder %s12, 4
      %s22 = sphi 0, %s24
      %s25 = sphi 0, %s22
      %s26 = sphi 0, %s25
      %s42 = sphi 0, %s26
      %s46 = sphi 0, %s46
      %s48 = sphi 0, %s46
      %s49 = sphi 0, %s48
      %s63 = sphi 0, %s49
      %s67 = sphi 0, %s67
      %s69 = sphi 0, %s67
      %s70 = sphi 0, %s69
      %s84 = sphi 0, %s70
      %s90 = sphi 0, %s92
      %s93 = sphi 0, %s90
      %s94 = sphi 0, %s93
      %s110 = sphi 0, %s94
    $region4: #{tpu_custom_call.1} parent=1 // loop_header_branch
      %15 = sbr.rel (%p13) target = $region8
    $region5: #{tpu_custom_call.1} parent=1 // loop_body
      %s17 = ssub.s32 %s12, 1
      %s18 = ssub.s32 %s12, 2
      %s19 = sadd.s32 %s12, 1
      %s20 = ssub.s32 %s12, %s19
      %p21 = scmp.eq.s32.totalorder %s20, 0
      %s23 = sadd.s32 %s22, 1
      %s24 = scalar_select %p21, %s22, %s23
      %p27 = pneg %p21
      %p28 = scmp.eq.s32.totalorder %s12, 1
      %p29 = por %p27, %p28
      %p30 = scmp.ne.s32.totalorder %s22, %s25
      %p31 = scmp.eq.s32.totalorder %s12, 0
      %p32 = por %p30, %p31
      %p33 = scmp.ne.s32.totalorder %s22, %s25
      %p34 = scmp.eq.s32.totalorder %s17, 1
      %p35 = por %p33, %p34
      %p36 = scmp.ne.s32.totalorder %s25, %s26
      %p37 = scmp.eq.s32.totalorder %s17, 0
      %p38 = por %p36, %p37
      %p39 = scmp.ne.s32.totalorder %s25, %s26
      %p40 = scmp.eq.s32.totalorder %s18, 1
      %p41 = por %p39, %p40
      %p43 = scmp.ne.s32.totalorder %s26, %s42
      %p44 = scmp.eq.s32.totalorder %s18, 0
      %p45 = por %p43, %p44
      %s47 = sadd.s32 %s46, 1
      %p50 = scmp.eq.s32.totalorder %s12, 1
      %p51 = scmp.ne.s32.totalorder %s46, %s48
      %p52 = scmp.eq.s32.totalorder %s12, 0
      %p53 = por %p51, %p52
      %p54 = scmp.ne.s32.totalorder %s46, %s48
      %p55 = scmp.eq.s32.totalorder %s17, 1
      %p56 = por %p54, %p55
      %p57 = scmp.ne.s32.totalorder %s48, %s49
      %p58 = scmp.eq.s32.totalorder %s17, 0
      %p59 = por %p57, %p58
      %p60 = scmp.ne.s32.totalorder %s48, %s49
      %p61 = scmp.eq.s32.totalorder %s18, 1
      %p62 = por %p60, %p61
      %p64 = scmp.ne.s32.totalorder %s49, %s63
      %p65 = scmp.eq.s32.totalorder %s18, 0
      %p66 = por %p64, %p65
      %s68 = sadd.s32 %s67, 1
      %p71 = scmp.eq.s32.totalorder %s12, 1
      %p72 = scmp.ne.s32.totalorder %s67, %s69
      %p73 = scmp.eq.s32.totalorder %s12, 0
      %p74 = por %p72, %p73
      %p75 = scmp.ne.s32.totalorder %s67, %s69
      %p76 = scmp.eq.s32.totalorder %s17, 1
      %p77 = por %p75, %p76
      %p78 = scmp.ne.s32.totalorder %s69, %s70
      %p79 = scmp.eq.s32.totalorder %s17, 0
      %p80 = por %p78, %p79
      %p81 = scmp.ne.s32.totalorder %s69, %s70
      %p82 = scmp.eq.s32.totalorder %s18, 1
      %p83 = por %p81, %p82
      %p85 = scmp.ne.s32.totalorder %s70, %s84
      %p86 = scmp.eq.s32.totalorder %s18, 0
      %p87 = por %p85, %p86
      %s88 = ssub.s32 %s12, %s19
      %p89 = scmp.eq.s32.totalorder %s88, 0
      %s91 = sadd.s32 %s90, 1
      %s92 = scalar_select %p89, %s90, %s91
      %p95 = pneg %p89
      %p96 = scmp.eq.s32.totalorder %s12, 1
      %p97 = por %p95, %p96
      %p98 = scmp.ne.s32.totalorder %s90, %s93
      %p99 = scmp.eq.s32.totalorder %s12, 0
      %p100 = por %p98, %p99
      %p101 = scmp.ne.s32.totalorder %s90, %s93
      %p102 = scmp.eq.s32.totalorder %s17, 1
      %p103 = por %p101, %p102
      %p104 = scmp.ne.s32.totalorder %s93, %s94
      %p105 = scmp.eq.s32.totalorder %s17, 0
      %p106 = por %p104, %p105
      %p107 = scmp.ne.s32.totalorder %s93, %s94
      %p108 = scmp.eq.s32.totalorder %s18, 1
      %p109 = por %p107, %p108
      %p111 = scmp.ne.s32.totalorder %s94, %s110
      %p112 = scmp.eq.s32.totalorder %s18, 0
      %p113 = por %p111, %p112
      %p114 = scmp.le.s32.totalorder 1, %s12
      %p115 = scmp.lt.s32.totalorder %s12, 3
      %p116 = pnand %p114, %p115
      %p117 = pneg %p116
      // Predicated region
      $region9: #{tpu_custom_call.1} parent=5 // pred_check
        _
      $region10: #{tpu_custom_call.1} parent=5 // pred_check_branch
        %119 = sbr.rel (%p116) target = $region12
      $region11: #{tpu_custom_call.1} parent=5 // pred_region
        %s120 = ssub.s32 %s12, 1
        // Predicated region
        $region13: #{tpu_custom_call.1} parent=11 // pred_check
          %p121 = pneg %p59
        $region14: #{tpu_custom_call.1} parent=11 // pred_check_branch
          %123 = sbr.rel (%p121) target = $region16
        $region15: #{tpu_custom_call.1} parent=11 // pred_region
          _
        $region16: #{tpu_custom_call.1} parent=11 // pred_fallthru
          _
        // Predicated region
        $region17: #{tpu_custom_call.1} parent=11 // pred_check
          %p124 = pneg %p80
        $region18: #{tpu_custom_call.1} parent=11 // pred_check_branch
          %126 = sbr.rel (%p124) target = $region20
        $region19: #{tpu_custom_call.1} parent=11 // pred_region
          _
        $region20: #{tpu_custom_call.1} parent=11 // pred_fallthru
          _
      $region12: #{tpu_custom_call.1} parent=5 // pred_fallthru
        _
      %p127 = scmp.lt.s32.totalorder %s12, 2
      // Predicated region
      $region21: #{tpu_custom_call.1} parent=5 // pred_check
        %p128 = pneg %p127
      $region22: #{tpu_custom_call.1} parent=5 // pred_check_branch
        %130 = sbr.rel (%p128) target = $region24
      $region23: #{tpu_custom_call.1} parent=5 // pred_region
        // Predicated region
        $region25: #{tpu_custom_call.1} parent=23 // pred_check
          %p131 = pneg %p32
        $region26: #{tpu_custom_call.1} parent=23 // pred_check_branch
          %133 = sbr.rel (%p131) target = $region28
        $region27: #{tpu_custom_call.1} parent=23 // pred_region
          %s134 = smul.u32 16, %s12
          %p135 = scmp.lt.s32.totalorder %s134, 31
          %s136 = scalar_select %p135, %s134, 31
          %s137 = smul.addr %s136, 8
          %s138 = scalar_lea.vmem %s0, %s137
          %s139 = smul.u32 16, %s12
        $region28: #{tpu_custom_call.1} parent=23 // pred_fallthru
          _
      $region24: #{tpu_custom_call.1} parent=5 // pred_fallthru
        _
      %p140 = scmp.le.s32.totalorder 1, %s12
      %p141 = scmp.lt.s32.totalorder %s12, 3
      %p142 = pnand %p140, %p141
      %p143 = pneg %p142
      // Predicated region
      $region29: #{tpu_custom_call.1} parent=5 // pred_check
        _
      $region30: #{tpu_custom_call.1} parent=5 // pred_check_branch
        %145 = sbr.rel (%p142) target = $region32
      $region31: #{tpu_custom_call.1} parent=5 // pred_region
        %s146 = ssub.s32 %s12, 1
        %s147 = smul.u32 16, %s17
        %p148 = scmp.lt.s32.totalorder %s147, 31
        %s149 = scalar_select %p148, %s147, 31
        %s150 = smul.addr %s149, 8
        %s151 = scalar_lea.vmem %s0, %s150
        %p152 = pneg %p38
        %p153 = pneg %p35
        %p154 = pneg %p59
        %p155 = pneg %p56
        %p156 = pneg %p80
        %p157 = pneg %p77
        %p158 = pneg %p106
        %p159 = pneg %p103
        %s160 = sand.u32 %s93, 1
        %s161 = scalar_lea.sflag [#allocation3], %s160
        %s162 = sand.u32 %s93, 1
        %s163 = smul.addr %s162, 512
        %s164 = scalar_lea.vmem [#allocation2], %s163
        %s165 = smul.u32 16, %s17
        %p166 = scmp.lt.s32.totalorder %s165, 31
        %s167 = scalar_select %p166, %s165, 31
        %s168 = smul.addr %s167, 8
        %s169 = scalar_lea.vmem %s0, %s168
        %s170 = smul.u32 16, %s17
        %s171 = smul.u32 16, %s17
        %v172 = vld [vmem:[%s169] sm:$0xff]
        %v173 = vld [vmem:[%s169 + $0x8] sm:$0xff]
        %v174 = vld [vmem:[%s169 + $0x10] sm:$0xff]
        %v175 = vld [vmem:[%s169 + $0x18] sm:$0xff]
        %v176 = vld [vmem:[%s169 + $0x20] sm:$0xff]
        %v177 = vld [vmem:[%s169 + $0x28] sm:$0xff]
        %v178 = vld [vmem:[%s169 + $0x30] sm:$0xff]
        %v179 = vld [vmem:[%s169 + $0x38] sm:$0xff]
        %v180 = vld [vmem:[%s169 + $0x40] sm:$0xff]
        %v181 = vld [vmem:[%s169 + $0x48] sm:$0xff]
        %v182 = vld [vmem:[%s169 + $0x50] sm:$0xff]
        %v183 = vld [vmem:[%s169 + $0x58] sm:$0xff]
        %v184 = vld [vmem:[%s169 + $0x60] sm:$0xff]
        %v185 = vld [vmem:[%s169 + $0x68] sm:$0xff]
        %v186 = vld [vmem:[%s169 + $0x70] sm:$0xff]
        %v187 = vld [vmem:[%s169 + $0x78] sm:$0xff]
        %v188 = vld [vmem:[%s1] sm:$0x77]
        %v189 = vld [vmem:[%s1 + $0x8] sm:$0x77]
        %v190 = vld [vmem:[%s2] sm:$0xf]
        %v192 = vlaneseq
        %v193 = vshrl.u32 %v192, 7
        %v194 = vsub.s32 0, %v193
        %v195 = vrot.slane %v190, %v194
        %v196 = vlaneseq
        %v197 = vshrl.u32 %v196, 7
        %v198 = vsub.s32 1, %v197
        %v199 = vrot.slane %v190, %v198
        %v200 = vlaneseq
        %v201 = vshrl.u32 %v200, 7
        %v202 = vsub.s32 2, %v201
        %v203 = vrot.slane %v190, %v202
        %v204 = vlaneseq
        %v205 = vshrl.u32 %v204, 7
        %v206 = vsub.s32 3, %v205
        %v207 = vrot.slane %v190, %v206
        %v214 = vcombine.high %v188, %v188
        %v215 = vcombine.high %v189, %v189
        %vm216 = vcmask 23552
        %v218 = vsel %vm216, %v172, 0
        %v221 = vsel %vm216, %v173, 0
        %v224 = vsel %vm216, %v174, 0
        %v227 = vsel %vm216, %v175, 0
        %v230 = vsel %vm216, %v176, 0
        %v233 = vsel %vm216, %v177, 0
        %v236 = vsel %vm216, %v178, 0
        %v239 = vsel %vm216, %v179, 0
        %v242 = vsel %vm216, %v180, 0
        %v245 = vsel %vm216, %v181, 0
        %v248 = vsel %vm216, %v182, 0
        %v251 = vsel %vm216, %v183, 0
        %v254 = vsel %vm216, %v184, 0
        %v257 = vsel %vm216, %v185, 0
        %v260 = vsel %vm216, %v186, 0
        %v263 = vsel %vm216, %v187, 0
        %vm265 = vcmask 1042432
        %v266 = vsel %vm265, %v188, 0
        %v268 = vsel %vm265, %v214, 0
        %v270 = vsel %vm265, %v189, 0
        %v272 = vsel %vm265, %v215, 0
        %274 = vmatprep.subr.mxu0 %v268
        %275 = vmatpush1.msra.mxu0 %v266
        %276 = vmatprep.subr.mxu0 0.0
        %277 = vmatpush1.msra.mxu0 0.0
        %278 = vmatprep.subr.mxu0 0.0
        %279 = vmatpush1.msra.mxu0 0.0
        %280 = vmatprep.subr.mxu0 0.0
        %281 = vmatpush1.msra.mxu0 0.0
        %282 = vmatprep.subr.mxu0 0.0
        %283 = vmatpush1.msra.mxu0 0.0
        %284 = vmatprep.subr.mxu0 0.0
        %285 = vmatpush1.msra.mxu0 0.0
        %286 = vmatprep.subr.mxu0 0.0
        %287 = vmatpush1.msra.mxu0 0.0
        %288 = vmatprep.subr.mxu0 0.0
        %289 = vmatpush1.msra.mxu0 0.0
        %290 = vmatprep.subr.mxu0 0.0
        %291 = vmatpush1.msra.mxu0 0.0
        %292 = vmatprep.subr.mxu0 0.0
        %293 = vmatpush1.msra.mxu0 0.0
        %294 = vmatprep.subr.mxu0 0.0
        %295 = vmatpush1.msra.mxu0 0.0
        %296 = vmatprep.subr.mxu0 0.0
        %297 = vmatpush1.msra.mxu0 0.0
        %298 = vmatprep.subr.mxu0 0.0
        %299 = vmatpush1.msra.mxu0 0.0
        %300 = vmatprep.subr.mxu0 0.0
        %301 = vmatpush1.msra.mxu0 0.0
        %302 = vmatprep.subr.mxu0 0.0
        %303 = vmatpush1.msra.mxu0 0.0
        %304 = vmatprep.subr.mxu0 0.0
        %305 = vmatpush1.msra.mxu0 0.0
        %306 = vmatprep.subr.mxu0 0.0
        %307 = vmatpush1.msra.mxu0 0.0
        %308 = vmatprep.subr.mxu0 0.0
        %309 = vmatpush1.msra.mxu0 0.0
        %310 = vmatprep.subr.mxu0 0.0
        %311 = vmatpush1.msra.mxu0 0.0
        %312 = vmatprep.subr.mxu0 0.0
        %313 = vmatpush1.msra.mxu0 0.0
        %314 = vmatprep.subr.mxu0 0.0
        %315 = vmatpush1.msra.mxu0 0.0
        %316 = vmatprep.subr.mxu0 0.0
        %317 = vmatpush1.msra.mxu0 0.0
        %318 = vmatprep.subr.mxu0 0.0
        %319 = vmatpush1.msra.mxu0 0.0
        %320 = vmatprep.subr.mxu0 0.0
        %321 = vmatpush1.msra.mxu0 0.0
        %322 = vmatprep.subr.mxu0 0.0
        %323 = vmatpush1.msra.mxu0 0.0
        %324 = vmatprep.subr.mxu0 0.0
        %325 = vmatpush1.msra.mxu0 0.0
        %326 = vmatprep.subr.mxu0 0.0
        %327 = vmatpush1.msra.mxu0 0.0
        %328 = vmatprep.subr.mxu0 0.0
        %329 = vmatpush1.msra.mxu0 0.0
        %330 = vmatprep.subr.mxu0 0.0
        %331 = vmatpush1.msra.mxu0 0.0
        %332 = vmatprep.subr.mxu0 0.0
        %333 = vmatpush1.msra.mxu0 0.0
        %334 = vmatprep.subr.mxu0 0.0
        %335 = vmatpush1.msra.mxu0 0.0
        %336 = vmatprep.subr.mxu0 0.0
        %337 = vmatpush1.msra.mxu0 0.0
        %338 = vmatprep.mubr.f32.mxu0 0.0
        %339 = vmatmul.mubr.f32.gmra.mrb[0].mxu0 %v218
        %v340 = vpop.f32.mrb[0].mxu0
        %v341 = vadd.f32 %v195, %v340
        %v342 = vpop.f32.mrb[0].mxu0
        %v343 = vadd.f32 %v199, %v342
        %344 = vmatprep.mubr.f32.mxu0 0.0
        %345 = vmatmul.mubr.f32.gmra.mrb[0].mxu0 %v221
        %v346 = vpop.f32.mrb[0].mxu0
        %v347 = vadd.f32 %v195, %v346
        %v348 = vpop.f32.mrb[0].mxu0
        %v349 = vadd.f32 %v199, %v348
        %350 = vmatprep.mubr.f32.mxu0 0.0
        %351 = vmatmul.mubr.f32.gmra.mrb[0].mxu0 %v224
        %v352 = vpop.f32.mrb[0].mxu0
        %v353 = vadd.f32 %v195, %v352
        %v354 = vpop.f32.mrb[0].mxu0
        %v355 = vadd.f32 %v199, %v354
        %356 = vmatprep.mubr.f32.mxu0 0.0
        %357 = vmatmul.mubr.f32.gmra.mrb[0].mxu0 %v227
        %v358 = vpop.f32.mrb[0].mxu0
        %v359 = vadd.f32 %v195, %v358
        %v360 = vpop.f32.mrb[0].mxu0
        %v361 = vadd.f32 %v199, %v360
        %362 = vmatprep.mubr.f32.mxu0 0.0
        %363 = vmatmul.mubr.f32.gmra.mrb[0].mxu0 %v230
        %v364 = vpop.f32.mrb[0].mxu0
        %v365 = vadd.f32 %v195, %v364
        %v366 = vpop.f32.mrb[0].mxu0
        %v367 = vadd.f32 %v199, %v366
        %368 = vmatprep.mubr.f32.mxu0 0.0
        %369 = vmatmul.mubr.f32.gmra.mrb[0].mxu0 %v233
        %v370 = vpop.f32.mrb[0].mxu0
        %v371 = vadd.f32 %v195, %v370
        %v372 = vpop.f32.mrb[0].mxu0
        %v373 = vadd.f32 %v199, %v372
        %374 = vmatprep.mubr.f32.mxu0 0.0
        %375 = vmatmul.mubr.f32.gmra.mrb[0].mxu0 %v236
        %v376 = vpop.f32.mrb[0].mxu0
        %v377 = vadd.f32 %v195, %v376
        %v378 = vpop.f32.mrb[0].mxu0
        %v379 = vadd.f32 %v199, %v378
        %380 = vmatprep.mubr.f32.mxu0 0.0
        %381 = vmatmul.mubr.f32.gmra.mrb[0].mxu0 %v239
        %v382 = vpop.f32.mrb[0].mxu0
        %v383 = vadd.f32 %v195, %v382
        %v384 = vpop.f32.mrb[0].mxu0
        %v385 = vadd.f32 %v199, %v384
        %386 = vmatprep.mubr.f32.mxu0 0.0
        %387 = vmatmul.mubr.f32.gmra.mrb[0].mxu0 %v242
        %v388 = vpop.f32.mrb[0].mxu0
        %v389 = vadd.f32 %v195, %v388
        %v390 = vpop.f32.mrb[0].mxu0
        %v391 = vadd.f32 %v199, %v390
        %392 = vmatprep.mubr.f32.mxu0 0.0
        %393 = vmatmul.mubr.f32.gmra.mrb[0].mxu0 %v245
        %v394 = vpop.f32.mrb[0].mxu0
        %v395 = vadd.f32 %v195, %v394
        %v396 = vpop.f32.mrb[0].mxu0
        %v397 = vadd.f32 %v199, %v396
        %398 = vmatprep.mubr.f32.mxu0 0.0
        %399 = vmatmul.mubr.f32.gmra.mrb[0].mxu0 %v248
        %v400 = vpop.f32.mrb[0].mxu0
        %v401 = vadd.f32 %v195, %v400
        %v402 = vpop.f32.mrb[0].mxu0
        %v403 = vadd.f32 %v199, %v402
        %404 = vmatprep.mubr.f32.mxu0 0.0
        %405 = vmatmul.mubr.f32.gmra.mrb[0].mxu0 %v251
        %v406 = vpop.f32.mrb[0].mxu0
        %v407 = vadd.f32 %v195, %v406
        %v408 = vpop.f32.mrb[0].mxu0
        %v409 = vadd.f32 %v199, %v408
        %410 = vmatprep.mubr.f32.mxu0 0.0
        %411 = vmatmul.mubr.f32.gmra.mrb[0].mxu0 %v254
        %v412 = vpop.f32.mrb[0].mxu0
        %v413 = vadd.f32 %v195, %v412
        %v414 = vpop.f32.mrb[0].mxu0
        %v415 = vadd.f32 %v199, %v414
        %416 = vmatprep.mubr.f32.mxu0 0.0
        %417 = vmatmul.mubr.f32.gmra.mrb[0].mxu0 %v257
        %v418 = vpop.f32.mrb[0].mxu0
        %v419 = vadd.f32 %v195, %v418
        %v420 = vpop.f32.mrb[0].mxu0
        %v421 = vadd.f32 %v199, %v420
        %422 = vmatprep.mubr.f32.mxu0 0.0
        %423 = vmatmul.mubr.f32.gmra.mrb[0].mxu0 %v260
        %v424 = vpop.f32.mrb[0].mxu0
        %v425 = vadd.f32 %v195, %v424
        %v426 = vpop.f32.mrb[0].mxu0
        %v427 = vadd.f32 %v199, %v426
        %428 = vmatprep.mubr.f32.mxu0 0.0
        %429 = vmatmul.mubr.f32.gmra.mrb[0].mxu0 %v263
        %v430 = vpop.f32.mrb[0].mxu0
        %v431 = vadd.f32 %v195, %v430
        %v432 = vpop.f32.mrb[0].mxu0
        %v433 = vadd.f32 %v199, %v432
        %434 = vdwg.mxu0
        %435 = vmatprep.subr.mxu0 %v272
        %436 = vmatpush1.msra.mxu0 %v270
        %437 = vmatprep.subr.mxu0 0.0
        %438 = vmatpush1.msra.mxu0 0.0
        %439 = vmatprep.subr.mxu0 0.0
        %440 = vmatpush1.msra.mxu0 0.0
        %441 = vmatprep.subr.mxu0 0.0
        %442 = vmatpush1.msra.mxu0 0.0
        %443 = vmatprep.subr.mxu0 0.0
        %444 = vmatpush1.msra.mxu0 0.0
        %445 = vmatprep.subr.mxu0 0.0
        %446 = vmatpush1.msra.mxu0 0.0
        %447 = vmatprep.subr.mxu0 0.0
        %448 = vmatpush1.msra.mxu0 0.0
        %449 = vmatprep.subr.mxu0 0.0
        %450 = vmatpush1.msra.mxu0 0.0
        %451 = vmatprep.subr.mxu0 0.0
        %452 = vmatpush1.msra.mxu0 0.0
        %453 = vmatprep.subr.mxu0 0.0
        %454 = vmatpush1.msra.mxu0 0.0
        %455 = vmatprep.subr.mxu0 0.0
        %456 = vmatpush1.msra.mxu0 0.0
        %457 = vmatprep.subr.mxu0 0.0
        %458 = vmatpush1.msra.mxu0 0.0
        %459 = vmatprep.subr.mxu0 0.0
        %460 = vmatpush1.msra.mxu0 0.0
        %461 = vmatprep.subr.mxu0 0.0
        %462 = vmatpush1.msra.mxu0 0.0
        %463 = vmatprep.subr.mxu0 0.0
        %464 = vmatpush1.msra.mxu0 0.0
        %465 = vmatprep.subr.mxu0 0.0
        %466 = vmatpush1.msra.mxu0 0.0
        %467 = vmatprep.subr.mxu0 0.0
        %468 = vmatpush1.msra.mxu0 0.0
        %469 = vmatprep.subr.mxu0 0.0
        %470 = vmatpush1.msra.mxu0 0.0
        %471 = vmatprep.subr.mxu0 0.0
        %472 = vmatpush1.msra.mxu0 0.0
        %473 = vmatprep.subr.mxu0 0.0
        %474 = vmatpush1.msra.mxu0 0.0
        %475 = vmatprep.subr.mxu0 0.0
        %476 = vmatpush1.msra.mxu0 0.0
        %477 = vmatprep.subr.mxu0 0.0
        %478 = vmatpush1.msra.mxu0 0.0
        %479 = vmatprep.subr.mxu0 0.0
        %480 = vmatpush1.msra.mxu0 0.0
        %481 = vmatprep.subr.mxu0 0.0
        %482 = vmatpush1.msra.mxu0 0.0
        %483 = vmatprep.subr.mxu0 0.0
        %484 = vmatpush1.msra.mxu0 0.0
        %485 = vmatprep.subr.mxu0 0.0
        %486 = vmatpush1.msra.mxu0 0.0
        %487 = vmatprep.subr.mxu0 0.0
        %488 = vmatpush1.msra.mxu0 0.0
        %489 = vmatprep.subr.mxu0 0.0
        %490 = vmatpush1.msra.mxu0 0.0
        %491 = vmatprep.subr.mxu0 0.0
        %492 = vmatpush1.msra.mxu0 0.0
        %493 = vmatprep.subr.mxu0 0.0
        %494 = vmatpush1.msra.mxu0 0.0
        %495 = vmatprep.subr.mxu0 0.0
        %496 = vmatpush1.msra.mxu0 0.0
        %497 = vmatprep.subr.mxu0 0.0
        %498 = vmatpush1.msra.mxu0 0.0
        %499 = vmatprep.mubr.f32.mxu0 0.0
        %500 = vmatmul.mubr.f32.gmra.mrb[0].mxu0 %v218
        %v501 = vpop.f32.mrb[0].mxu0
        %v502 = vadd.f32 %v203, %v501
        %v503 = vpop.f32.mrb[0].mxu0
        %v504 = vadd.f32 %v207, %v503
        %505 = vmatprep.mubr.f32.mxu0 0.0
        %506 = vmatmul.mubr.f32.gmra.mrb[0].mxu0 %v221
        %v507 = vpop.f32.mrb[0].mxu0
        %v508 = vadd.f32 %v203, %v507
        %v509 = vpop.f32.mrb[0].mxu0
        %v510 = vadd.f32 %v207, %v509
        %511 = vmatprep.mubr.f32.mxu0 0.0
        %512 = vmatmul.mubr.f32.gmra.mrb[0].mxu0 %v224
        %v513 = vpop.f32.mrb[0].mxu0
        %v514 = vadd.f32 %v203, %v513
        %v515 = vpop.f32.mrb[0].mxu0
        %v516 = vadd.f32 %v207, %v515
        %517 = vmatprep.mubr.f32.mxu0 0.0
        %518 = vmatmul.mubr.f32.gmra.mrb[0].mxu0 %v227
        %v519 = vpop.f32.mrb[0].mxu0
        %v520 = vadd.f32 %v203, %v519
        %v521 = vpop.f32.mrb[0].mxu0
        %v522 = vadd.f32 %v207, %v521
        %523 = vmatprep.mubr.f32.mxu0 0.0
        %524 = vmatmul.mubr.f32.gmra.mrb[0].mxu0 %v230
        %v525 = vpop.f32.mrb[0].mxu0
        %v526 = vadd.f32 %v203, %v525
        %v527 = vpop.f32.mrb[0].mxu0
        %v528 = vadd.f32 %v207, %v527
        %529 = vmatprep.mubr.f32.mxu0 0.0
        %530 = vmatmul.mubr.f32.gmra.mrb[0].mxu0 %v233
        %v531 = vpop.f32.mrb[0].mxu0
        %v532 = vadd.f32 %v203, %v531
        %v533 = vpop.f32.mrb[0].mxu0
        %v534 = vadd.f32 %v207, %v533
        %535 = vmatprep.mubr.f32.mxu0 0.0
        %536 = vmatmul.mubr.f32.gmra.mrb[0].mxu0 %v236
        %v537 = vpop.f32.mrb[0].mxu0
        %v538 = vadd.f32 %v203, %v537
        %v539 = vpop.f32.mrb[0].mxu0
        %v540 = vadd.f32 %v207, %v539
        %541 = vmatprep.mubr.f32.mxu0 0.0
        %542 = vmatmul.mubr.f32.gmra.mrb[0].mxu0 %v239
        %v543 = vpop.f32.mrb[0].mxu0
        %v544 = vadd.f32 %v203, %v543
        %v545 = vpop.f32.mrb[0].mxu0
        %v546 = vadd.f32 %v207, %v545
        %547 = vmatprep.mubr.f32.mxu0 0.0
        %548 = vmatmul.mubr.f32.gmra.mrb[0].mxu0 %v242
        %v549 = vpop.f32.mrb[0].mxu0
        %v550 = vadd.f32 %v203, %v549
        %v551 = vpop.f32.mrb[0].mxu0
        %v552 = vadd.f32 %v207, %v551
        %553 = vmatprep.mubr.f32.mxu0 0.0
        %554 = vmatmul.mubr.f32.gmra.mrb[0].mxu0 %v245
        %v555 = vpop.f32.mrb[0].mxu0
        %v556 = vadd.f32 %v203, %v555
        %v557 = vpop.f32.mrb[0].mxu0
        %v558 = vadd.f32 %v207, %v557
        %559 = vmatprep.mubr.f32.mxu0 0.0
        %560 = vmatmul.mubr.f32.gmra.mrb[0].mxu0 %v248
        %v561 = vpop.f32.mrb[0].mxu0
        %v562 = vadd.f32 %v203, %v561
        %v563 = vpop.f32.mrb[0].mxu0
        %v564 = vadd.f32 %v207, %v563
        %565 = vmatprep.mubr.f32.mxu0 0.0
        %566 = vmatmul.mubr.f32.gmra.mrb[0].mxu0 %v251
        %v567 = vpop.f32.mrb[0].mxu0
        %v568 = vadd.f32 %v203, %v567
        %v569 = vpop.f32.mrb[0].mxu0
        %v570 = vadd.f32 %v207, %v569
        %571 = vmatprep.mubr.f32.mxu0 0.0
        %572 = vmatmul.mubr.f32.gmra.mrb[0].mxu0 %v254
        %v573 = vpop.f32.mrb[0].mxu0
        %v574 = vadd.f32 %v203, %v573
        %v575 = vpop.f32.mrb[0].mxu0
        %v576 = vadd.f32 %v207, %v575
        %577 = vmatprep.mubr.f32.mxu0 0.0
        %578 = vmatmul.mubr.f32.gmra.mrb[0].mxu0 %v257
        %v579 = vpop.f32.mrb[0].mxu0
        %v580 = vadd.f32 %v203, %v579
        %v581 = vpop.f32.mrb[0].mxu0
        %v582 = vadd.f32 %v207, %v581
        %583 = vmatprep.mubr.f32.mxu0 0.0
        %584 = vmatmul.mubr.f32.gmra.mrb[0].mxu0 %v260
        %v585 = vpop.f32.mrb[0].mxu0
        %v586 = vadd.f32 %v203, %v585
        %v587 = vpop.f32.mrb[0].mxu0
        %v588 = vadd.f32 %v207, %v587
        %589 = vmatprep.mubr.f32.mxu0 0.0
        %590 = vmatmul.mubr.f32.gmra.mrb[0].mxu0 %v263
        %v591 = vpop.f32.mrb[0].mxu0
        %v592 = vadd.f32 %v203, %v591
        %v593 = vpop.f32.mrb[0].mxu0
        %v594 = vadd.f32 %v207, %v593
        %595 = vdwg.mxu0
        %596 = vst [vmem:[%s164] sm:$0xff] %v341
        %597 = vst [vmem:[%s164 + $0x8] sm:$0xff] %v343
        %598 = vst [vmem:[%s164 + $0x10] sm:$0xff] %v502
        %599 = vst [vmem:[%s164 + $0x18] sm:$0xff] %v504
        %600 = vst [vmem:[%s164 + $0x20] sm:$0xff] %v347
        %601 = vst [vmem:[%s164 + $0x28] sm:$0xff] %v349
        %602 = vst [vmem:[%s164 + $0x30] sm:$0xff] %v508
        %603 = vst [vmem:[%s164 + $0x38] sm:$0xff] %v510
        %604 = vst [vmem:[%s164 + $0x40] sm:$0xff] %v353
        %605 = vst [vmem:[%s164 + $0x48] sm:$0xff] %v355
        %606 = vst [vmem:[%s164 + $0x50] sm:$0xff] %v514
        %607 = vst [vmem:[%s164 + $0x58] sm:$0xff] %v516
        %608 = vst [vmem:[%s164 + $0x60] sm:$0xff] %v359
        %609 = vst [vmem:[%s164 + $0x68] sm:$0xff] %v361
        %610 = vst [vmem:[%s164 + $0x70] sm:$0xff] %v520
        %611 = vst [vmem:[%s164 + $0x78] sm:$0xff] %v522
        %612 = vst [vmem:[%s164 + $0x80] sm:$0xff] %v365
        %613 = vst [vmem:[%s164 + $0x88] sm:$0xff] %v367
        %614 = vst [vmem:[%s164 + $0x90] sm:$0xff] %v526
        %615 = vst [vmem:[%s164 + $0x98] sm:$0xff] %v528
        %616 = vst [vmem:[%s164 + $0xa0] sm:$0xff] %v371
        %617 = vst [vmem:[%s164 + $0xa8] sm:$0xff] %v373
        %618 = vst [vmem:[%s164 + $0xb0] sm:$0xff] %v532
        %619 = vst [vmem:[%s164 + $0xb8] sm:$0xff] %v534
        %620 = vst [vmem:[%s164 + $0xc0] sm:$0xff] %v377
        %621 = vst [vmem:[%s164 + $0xc8] sm:$0xff] %v379
        %622 = vst [vmem:[%s164 + $0xd0] sm:$0xff] %v538
        %623 = vst [vmem:[%s164 + $0xd8] sm:$0xff] %v540
        %624 = vst [vmem:[%s164 + $0xe0] sm:$0xff] %v383
        %625 = vst [vmem:[%s164 + $0xe8] sm:$0xff] %v385
        %626 = vst [vmem:[%s164 + $0xf0] sm:$0xff] %v544
        %627 = vst [vmem:[%s164 + $0xf8] sm:$0xff] %v546
        %628 = vst [vmem:[%s164 + $0x100] sm:$0xff] %v389
        %629 = vst [vmem:[%s164 + $0x108] sm:$0xff] %v391
        %630 = vst [vmem:[%s164 + $0x110] sm:$0xff] %v550
        %631 = vst [vmem:[%s164 + $0x118] sm:$0xff] %v552
        %632 = vst [vmem:[%s164 + $0x120] sm:$0xff] %v395
        %633 = vst [vmem:[%s164 + $0x128] sm:$0xff] %v397
        %634 = vst [vmem:[%s164 + $0x130] sm:$0xff] %v556
        %635 = vst [vmem:[%s164 + $0x138] sm:$0xff] %v558
        %636 = vst [vmem:[%s164 + $0x140] sm:$0xff] %v401
        %637 = vst [vmem:[%s164 + $0x148] sm:$0xff] %v403
        %638 = vst [vmem:[%s164 + $0x150] sm:$0xff] %v562
        %639 = vst [vmem:[%s164 + $0x158] sm:$0xff] %v564
        %640 = vst [vmem:[%s164 + $0x160] sm:$0xff] %v407
        %641 = vst [vmem:[%s164 + $0x168] sm:$0xff] %v409
        %642 = vst [vmem:[%s164 + $0x170] sm:$0xff] %v568
        %643 = vst [vmem:[%s164 + $0x178] sm:$0xff] %v570
        %644 = vst [vmem:[%s164 + $0x180] sm:$0xff] %v413
        %645 = vst [vmem:[%s164 + $0x188] sm:$0xff] %v415
        %646 = vst [vmem:[%s164 + $0x190] sm:$0xff] %v574
        %647 = vst [vmem:[%s164 + $0x198] sm:$0xff] %v576
        %648 = vst [vmem:[%s164 + $0x1a0] sm:$0xff] %v419
        %649 = vst [vmem:[%s164 + $0x1a8] sm:$0xff] %v421
        %650 = vst [vmem:[%s164 + $0x1b0] sm:$0xff] %v580
        %651 = vst [vmem:[%s164 + $0x1b8] sm:$0xff] %v582
        %652 = vst [vmem:[%s164 + $0x1c0] sm:$0xff] %v425
        %653 = vst [vmem:[%s164 + $0x1c8] sm:$0xff] %v427
        %654 = vst [vmem:[%s164 + $0x1d0] sm:$0xff] %v586
        %655 = vst [vmem:[%s164 + $0x1d8] sm:$0xff] %v588
        %656 = vst [vmem:[%s164 + $0x1e0] sm:$0xff] %v431
        %657 = vst [vmem:[%s164 + $0x1e8] sm:$0xff] %v433
        %658 = vst [vmem:[%s164 + $0x1f0] sm:$0xff] %v592
        %659 = vst [vmem:[%s164 + $0x1f8] sm:$0xff] %v594
        %s660 = sand.u32 %s93, 1
        %s661 = scalar_lea.sflag [#allocation3], %s660
        %s662 = sand.u32 %s93, 1
        %s663 = smul.addr %s662, 512
        %s664 = scalar_lea.vmem [#allocation2], %s663
        // Predicated region
        $region33: #{tpu_custom_call.1} parent=31 // pred_check
          %p665 = pneg %p103
        $region34: #{tpu_custom_call.1} parent=31 // pred_check_branch
          %667 = sbr.rel (%p665) target = $region36
        $region35: #{tpu_custom_call.1} parent=31 // pred_region
          %s668 = smul.u32 16, %s17
          %s670 = ssub.s32 8192, 8192
          %671 = vsyncadd %s661, %s670
          %s672 = smul.addr %s668, 4
          %s673 = smul.addr %s672, 128
          %s674 = scalar_lea.hbm %s3, %s673
          %s675 = sshll.u32 %s664, 4
          %s676 = int_to_ptr.vmem [resolvable:$true] %s675
          %681 = dma.vmem_to_hbm [thread:$0]  %s676, 8192, %s674, %s661, 512, 512, 32
        $region36: #{tpu_custom_call.1} parent=31 // pred_fallthru
          _
      $region32: #{tpu_custom_call.1} parent=5 // pred_fallthru
        _
      %p682 = scmp.le.s32.totalorder 2, %s12
      // Predicated region
      $region37: #{tpu_custom_call.1} parent=5 // pred_check
        %p683 = pneg %p682
      $region38: #{tpu_custom_call.1} parent=5 // pred_check_branch
        %685 = sbr.rel (%p683) target = $region40
      $region39: #{tpu_custom_call.1} parent=5 // pred_region
        %s686 = ssub.s32 %s12, 2
        // Predicated region
        $region41: #{tpu_custom_call.1} parent=39 // pred_check
          %p687 = pneg %p109
        $region42: #{tpu_custom_call.1} parent=39 // pred_check_branch
          %689 = sbr.rel (%p687) target = $region44
        $region43: #{tpu_custom_call.1} parent=39 // pred_region
          %s690 = sand.u32 %s94, 1
          %s691 = scalar_lea.sflag [#allocation3], %s690
          %s692 = sand.u32 %s94, 1
          %s693 = smul.addr %s692, 512
          %s694 = scalar_lea.vmem [#allocation2], %s693
          %695 = dma.done %s691, 8192
        $region44: #{tpu_custom_call.1} parent=39 // pred_fallthru
          _
      $region40: #{tpu_custom_call.1} parent=5 // pred_fallthru
        _
    $region6: #{tpu_custom_call.1} parent=1 // loop_footer
      %s16 = sadd.s32 1, %s12
    $region7: #{tpu_custom_call.1} parent=1 // loop_footer_branch
      %11 = sbr.rel target = $region3
    $region8: #{tpu_custom_call.1} parent=1 // loop_exit
      _
    %696 = vsyncpa [#allocation3], 1
    %s697 = scalar_lea.sflag [#allocation3], 1
    %698 = vsyncpa %s697, 1

</llo_original>
